<compile_context>
chip_gen: v6e
topology: v6e:2x2x1
jax: 0.10.0
libtpu: 0.0.40
codegen_flags: <defaults>
</compile_context>

<pallas_src>
import jax
import jax.numpy as jnp
from jax.experimental import pallas as pl
from jax.experimental.pallas import tpu as pltpu


# ---------------------------------------------------------------------------
# Kernel: FiLM modulation + SiLU over a lane-dense (rows, T) tile
# ---------------------------------------------------------------------------
def _silu(y):
    if y.dtype == jnp.float32:
        # exp and the approximate reciprocal both land in the EUP slot,
        # keeping the VALU slots free for the mul/add.
        return y * pl.reciprocal(1.0 + jnp.exp(-y), approx=True)
    # bf16 path (v6e/v7x have bf16 VPU/EUP); Mosaic lowers sigmoid natively.
    return y * jax.nn.sigmoid(y)


def film_kernel(gamma_ref, beta_ref, x_ref, o_ref):
    # gamma/beta: (row_tile, 1) resident blocks broadcast over the lane axis.
    y = x_ref[...] * gamma_ref[...] + beta_ref[...]
    o_ref[...] = _silu(y).astype(o_ref.dtype)


# ---------------------------------------------------------------------------
# Wrapper: tiny conditioning MLP in plain JAX + tiled pallas_call
# ---------------------------------------------------------------------------
def film_forward(x, cond, w1, w2, *, t_tile=None):
    B, C, T = x.shape
    c_cond = cond.shape[-1]
    assert w1.shape == (c_cond, C) and w2.shape == (C, 2 * C)

    # --- conditioning MLP hoisted out of the kernel (f32 math, ~1K MACs) ---
    h = cond.astype(jnp.float32) @ w1.astype(jnp.float32)
    h = h * jax.nn.sigmoid(h)                       # SiLU
    gb = h @ w2.astype(jnp.float32)
    gamma = gb[:, :C]                               # chunk(2, dim=-1)
    beta = gb[:, C:]

    # --- flatten to a lane-dense 2-D slab: rows = B*C, lanes = T ---
    R = B * C
    x2 = x.reshape(R, T)                            # free row-major reshape
    gamma = gamma.reshape(R, 1).astype(x.dtype)     # modulation in x's dtype
    beta = beta.reshape(R, 1).astype(x.dtype)

    itemsize = jnp.dtype(x.dtype).itemsize

    # Row tiling: whole R when small, 2048-row (8-multiple) tiles otherwise.
    row_tile = R if R <= 2048 else 2048
    grid_r = pl.cdiv(R, row_tile)

    # T tiling: target ~1 MiB per x tile, lane-dense 128-multiples, keep the
    # grid at least ~8 deep when T allows (megacore sharding + pipelining),
    # and prefer tiles that divide T (no masked partial last store).
    if t_tile is None:
        if T <= 128:
            t_tile = T
        else:
            target_bytes = 1 << 20
            t_tile = max(128, (target_bytes // (row_tile * itemsize)) // 128 * 128)
            cap_for_steps = max(128, (T // 8) // 128 * 128)
            t_tile = min(t_tile, cap_for_steps)
            t_tile = min(t_tile, max(128, (T // 128) * 128))
            if T % 128 == 0:
                while t_tile > 128 and T % t_tile != 0:
                    t_tile -= 128
    t_tile = int(t_tile)
    grid_t = pl.cdiv(T, t_tile)

    # VMEM limit from the actual working set (never clamp below it); cap well
    # under v7x's 64 MiB physical VMEM.
    io_tile = row_tile * t_tile * itemsize          # one x or out tile
    f32_tile = row_tile * t_tile * 4                # in-kernel intermediates
    need = 2 * 2 * io_tile + 3 * f32_tile + (2 << 20)
    vmem_limit = int(min(max(need, 32 << 20), 60 << 20))

    cost = pl.CostEstimate(
        flops=4 * R * T,                            # mul + add + silu mul/add
        transcendentals=2 * R * T,                  # exp + reciprocal
        bytes_accessed=2 * R * T * itemsize + 2 * R * 4,
    )

    out2 = pl.pallas_call(
        film_kernel,
        out_shape=jax.ShapeDtypeStruct((R, T), x.dtype),
        grid=(grid_r, grid_t),
        in_specs=[
            pl.BlockSpec((row_tile, 1), lambda r, t: (r, 0)),       # gamma
            pl.BlockSpec((row_tile, 1), lambda r, t: (r, 0)),       # beta
            pl.BlockSpec((row_tile, t_tile), lambda r, t: (r, t)),  # x tile
        ],
        out_specs=pl.BlockSpec((row_tile, t_tile), lambda r, t: (r, t)),
        compiler_params=pltpu.CompilerParams(
            dimension_semantics=("parallel", "parallel"),
            vmem_limit_bytes=vmem_limit,
        ),
        cost_estimate=cost,
    )(gamma, beta, x2)

    return out2.reshape(B, C, T)


# ---------------------------------------------------------------------------
# Pure-JAX reference mirroring the PyTorch forward
# ---------------------------------------------------------------------------
def film_reference(x, cond, w1, w2):
    h = cond @ w1
    h = h * jax.nn.sigmoid(h)
    gb = h @ w2
    C = x.shape[1]
    gamma, beta = gb[:, :C], gb[:, C:]
    y = x * gamma[:, :, None] + beta[:, :, None]
    return y * jax.nn.sigmoid(y)


if __name__ == "__main__":
    B, C_COND, C_OUT, T = 2, 32, 8, 256

    key = jax.random.PRNGKey(0)
    kx, kc, k1, k2 = jax.random.split(key, 4)

    x = jax.random.normal(kx, (B, C_OUT, T), dtype=jnp.float32)
    cond = jax.random.normal(kc, (B, C_COND), dtype=jnp.float32)
    # deterministic "nn.Linear(bias=False)"-style weights, stored transposed
    w1 = jax.random.normal(k1, (C_COND, C_OUT), dtype=jnp.float32) / jnp.sqrt(C_COND)
    w2 = jax.random.normal(k2, (C_OUT, 2 * C_OUT), dtype=jnp.float32) / jnp.sqrt(C_OUT)

    out = jax.block_until_ready(film_forward(x, cond, w1, w2))

    ref = film_reference(x, cond, w1, w2)
    assert out.shape == (B, C_OUT, T)
    # kernel sigmoid uses the EUP approximate reciprocal -> matching tolerance
    assert jnp.allclose(out, ref, atol=2e-2, rtol=2e-2), "mismatch vs reference"

    print("KERNEL_OK")
</pallas_src>

<mosaic_0001>
module attributes {stable_mosaic.version = 11 : i64} {
  func.func @film_kernel(%arg0: i32, %arg1: i32, %arg2: memref<16x1xf32, #tpu.memory_space<vmem>>, %arg3: memref<16x1xf32, #tpu.memory_space<vmem>>, %arg4: memref<16x128xf32, #tpu.memory_space<vmem>>, %arg5: memref<16x128xf32, #tpu.memory_space<vmem>>) attributes {dimension_semantics = [#tpu.dimension_semantics<parallel>, #tpu.dimension_semantics<parallel>], iteration_bounds = array<i64: 1, 2>, scalar_prefetch = 0 : i64, scratch_operands = 0 : i64, tpu.core_type = #tpu.core_type<tc>, window_params = [{transform_indices = @transform_0, window_bounds = array<i64: 16, 1>}, {transform_indices = @transform_1, window_bounds = array<i64: 16, 1>}, {transform_indices = @transform_2, window_bounds = array<i64: 16, 128>}, {transform_indices = @transform_3, window_bounds = array<i64: 16, 128>}]} {
    %c0 = arith.constant 0 : index
    %c0_0 = arith.constant 0 : index
    %0 = vector.load %arg4[%c0, %c0_0] : memref<16x128xf32, #tpu.memory_space<vmem>>, vector<16x128xf32>
    %c0_1 = arith.constant 0 : index
    %c0_2 = arith.constant 0 : index
    %1 = vector.load %arg2[%c0_1, %c0_2] : memref<16x1xf32, #tpu.memory_space<vmem>>, vector<16x1xf32>
    %2 = vector.broadcast %1 : vector<16x1xf32> to vector<16x128xf32>
    %3 = arith.mulf %0, %2 : vector<16x128xf32>
    %c0_3 = arith.constant 0 : index
    %c0_4 = arith.constant 0 : index
    %4 = vector.load %arg3[%c0_3, %c0_4] : memref<16x1xf32, #tpu.memory_space<vmem>>, vector<16x1xf32>
    %5 = vector.broadcast %4 : vector<16x1xf32> to vector<16x128xf32>
    %6 = arith.addf %3, %5 : vector<16x128xf32>
    %cst = arith.constant 0.000000e+00 : f32
    %7 = vector.broadcast %cst : f32 to vector<16x128xf32>
    %8 = arith.subf %7, %6 : vector<16x128xf32>
    %9 = math.exp %8 : vector<16x128xf32>
    %cst_5 = arith.constant 1.000000e+00 : f32
    %10 = vector.broadcast %cst_5 : f32 to vector<16x128xf32>
    %11 = arith.addf %10, %9 : vector<16x128xf32>
    %12 = tpu.reciprocal %11 {approx = true} : vector<16x128xf32> -> vector<16x128xf32>
    %13 = arith.mulf %6, %12 : vector<16x128xf32>
    %c0_6 = arith.constant 0 : index
    %c0_7 = arith.constant 0 : index
    %14 = vector.load %arg5[%c0_6, %c0_7] : memref<16x128xf32, #tpu.memory_space<vmem>>, vector<16x128xf32>
    tpu.vector_store %arg5[%c0_6, %c0_7], %13 {strides = array<i32>} : memref<16x128xf32, #tpu.memory_space<vmem>>, vector<16x128xf32>,
    return
  }
  func.func @transform_0(%arg0: i32, %arg1: i32) -> (i32, i32) {
    %c0_i32 = arith.constant 0 : i32
    %c0_i32_0 = arith.constant 0 : i32
    return %arg0, %c0_i32 : i32, i32
  }
  func.func @transform_1(%arg0: i32, %arg1: i32) -> (i32, i32) {
    %c0_i32 = arith.constant 0 : i32
    %c0_i32_0 = arith.constant 0 : i32
    return %arg0, %c0_i32 : i32, i32
  }
  func.func @transform_2(%arg0: i32, %arg1: i32) -> (i32, i32) {
    %c0_i32 = arith.constant 0 : i32
    return %arg0, %arg1 : i32, i32
  }
  func.func @transform_3(%arg0: i32, %arg1: i32) -> (i32, i32) {
    %c0_i32 = arith.constant 0 : i32
    return %arg0, %arg1 : i32, i32
  }
}

</mosaic_0001>

<llo_original>
// kernel: tpu_custom_call.1
$region0: #{tpu_custom_call.1}
  #allocation0 [shape = 'u32[]', space=smem, size = 0x4, offset = 0x4, fixed_abs, tag = 'smem constant byte address 0x4 - core index']
  #allocation1 [shape = 'u32[144,128]{1,0:T(1,128)}', space=vmem, size = 0x12000, scoped, tag = 'internal scratch']
  %s0 = inlined_call_operand.vmem [shape: f32[16,1], index: 0, kind: input, shape index: {}]
  %s1 = inlined_call_operand.vmem [shape: f32[16,1], index: 1, kind: input, shape index: {}]
  %s2 = inlined_call_operand.vmem [shape: f32[16,256], index: 2, kind: input, shape index: {}]
  %s3 = inlined_call_operand.hbm [shape: f32[16,256], index: 3, kind: output, shape index: {}]
  %s4 = sld [smem:[#allocation0]]
  $region83: #{tpu_custom_call.1} parent=0
    _
  %s6 = ssub.s32 1, %s4
  %s7 = scalar_select 0, %s6, %s4
  $region1: #{tpu_custom_call.1} parent=0
    #allocation2 [shape = 'u8[16384]{0}', space=vmem, size = 0x4000, scoped, tag = 'input window, operand 2']
    #allocation3 [shape = 'u8[16384]{0}', space=vmem, size = 0x4000, scoped, tag = 'output window, operand 0']
    #allocation4 [shape = 's32[2]{0}', space=sflag, size = 0x8, scoped, tag = 'scoped memory for tpu_custom_call.1']
    %8 = vsyncpa [#allocation4], 0
    %s9 = scalar_lea.sflag [#allocation4], 1
    %10 = vsyncpa %s9, 0
    loop: start=0, step=1, limit=4
    $region2: #{tpu_custom_call.1} parent=1 // loop_pre_header
      _
    $region3: #{tpu_custom_call.1} parent=1 // loop_header
      %s12 = sphi 0, %s16
      %p13 = scmp.ge.s32.totalorder %s12, 4
      %s19 = sphi 0, %s31
      %s20 = sphi 0, %s27
      %s21 = sphi 0, %s19
      %s22 = sphi 0, %s20
      %s23 = sphi 0, %s21
      %s24 = sphi 0, %s22
      %s34 = sphi 0, %s36
      %s37 = sphi 0, %s34
      %s38 = sphi 0, %s37
      %s54 = sphi 0, %s38
      %s60 = sphi 0, %s62
      %s63 = sphi 0, %s60
      %s64 = sphi 0, %s63
      %s80 = sphi 0, %s64
      %s88 = sphi 0, %s90
      %s91 = sphi 0, %s88
      %s92 = sphi 0, %s91
      %s108 = sphi 0, %s92
      %s116 = sphi 0, %s118
      %s119 = sphi 0, %s116
      %s120 = sphi 0, %s119
      %s136 = sphi 0, %s120
    $region4: #{tpu_custom_call.1} parent=1 // loop_header_branch
      %15 = sbr.rel (%p13) target = $region8
    $region5: #{tpu_custom_call.1} parent=1 // loop_body
      %s17 = ssub.s32 %s12, 1
      %s18 = ssub.s32 %s12, 2
      %s25 = sadd.s32 1, %s20
      %p26 = scmp.ge.s32.totalorder %s25, 2
      %s27 = scalar_select %p26, 0, %s25
      %s28 = sadd.s32 1, %s19
      %s29 = scalar_select %p26, %s28, %s19
      %p30 = scmp.ge.s32.totalorder %s29, 1
      %s31 = scalar_select %p30, 0, %s29
      %s32 = ssub.s32 %s19, %s31
      %p33 = scmp.eq.s32.totalorder %s32, 0
      %s35 = sadd.s32 %s34, 1
      %s36 = scalar_select %p33, %s34, %s35
      %p39 = pneg %p33
      %p40 = scmp.eq.s32.totalorder %s12, 1
      %p41 = por %p39, %p40
      %p42 = scmp.ne.s32.totalorder %s34, %s37
      %p43 = scmp.eq.s32.totalorder %s12, 0
      %p44 = por %p42, %p43
      %p45 = scmp.ne.s32.totalorder %s34, %s37
      %p46 = scmp.eq.s32.totalorder %s17, 1
      %p47 = por %p45, %p46
      %p48 = scmp.ne.s32.totalorder %s37, %s38
      %p49 = scmp.eq.s32.totalorder %s17, 0
      %p50 = por %p48, %p49
      %p51 = scmp.ne.s32.totalorder %s37, %s38
      %p52 = scmp.eq.s32.totalorder %s18, 1
      %p53 = por %p51, %p52
      %p55 = scmp.ne.s32.totalorder %s38, %s54
      %p56 = scmp.eq.s32.totalorder %s18, 0
      %p57 = por %p55, %p56
      %s58 = ssub.s32 %s19, %s31
      %p59 = scmp.eq.s32.totalorder %s58, 0
      %s61 = sadd.s32 %s60, 1
      %s62 = scalar_select %p59, %s60, %s61
      %p65 = pneg %p59
      %p66 = scmp.eq.s32.totalorder %s12, 1
      %p67 = por %p65, %p66
      %p68 = scmp.ne.s32.totalorder %s60, %s63
      %p69 = scmp.eq.s32.totalorder %s12, 0
      %p70 = por %p68, %p69
      %p71 = scmp.ne.s32.totalorder %s60, %s63
      %p72 = scmp.eq.s32.totalorder %s17, 1
      %p73 = por %p71, %p72
      %p74 = scmp.ne.s32.totalorder %s63, %s64
      %p75 = scmp.eq.s32.totalorder %s17, 0
      %p76 = por %p74, %p75
      %p77 = scmp.ne.s32.totalorder %s63, %s64
      %p78 = scmp.eq.s32.totalorder %s18, 1
      %p79 = por %p77, %p78
      %p81 = scmp.ne.s32.totalorder %s64, %s80
      %p82 = scmp.eq.s32.totalorder %s18, 0
      %p83 = por %p81, %p82
      %s84 = ssub.s32 %s19, %s31
      %s85 = ssub.s32 %s20, %s27
      %s86 = sor.u32 %s84, %s85
      %p87 = scmp.eq.s32.totalorder %s86, 0
      %s89 = sadd.s32 %s88, 1
      %s90 = scalar_select %p87, %s88, %s89
      %p93 = pneg %p87
      %p94 = scmp.eq.s32.totalorder %s12, 1
      %p95 = por %p93, %p94
      %p96 = scmp.ne.s32.totalorder %s88, %s91
      %p97 = scmp.eq.s32.totalorder %s12, 0
      %p98 = por %p96, %p97
      %p99 = scmp.ne.s32.totalorder %s88, %s91
      %p100 = scmp.eq.s32.totalorder %s17, 1
      %p101 = por %p99, %p100
      %p102 = scmp.ne.s32.totalorder %s91, %s92
      %p103 = scmp.eq.s32.totalorder %s17, 0
      %p104 = por %p102, %p103
      %p105 = scmp.ne.s32.totalorder %s91, %s92
      %p106 = scmp.eq.s32.totalorder %s18, 1
      %p107 = por %p105, %p106
      %p109 = scmp.ne.s32.totalorder %s92, %s108
      %p110 = scmp.eq.s32.totalorder %s18, 0
      %p111 = por %p109, %p110
      %s112 = ssub.s32 %s19, %s31
      %s113 = ssub.s32 %s20, %s27
      %s114 = sor.u32 %s112, %s113
      %p115 = scmp.eq.s32.totalorder %s114, 0
      %s117 = sadd.s32 %s116, 1
      %s118 = scalar_select %p115, %s116, %s117
      %p121 = pneg %p115
      %p122 = scmp.eq.s32.totalorder %s12, 1
      %p123 = por %p121, %p122
      %p124 = scmp.ne.s32.totalorder %s116, %s119
      %p125 = scmp.eq.s32.totalorder %s12, 0
      %p126 = por %p124, %p125
      %p127 = scmp.ne.s32.totalorder %s116, %s119
      %p128 = scmp.eq.s32.totalorder %s17, 1
      %p129 = por %p127, %p128
      %p130 = scmp.ne.s32.totalorder %s119, %s120
      %p131 = scmp.eq.s32.totalorder %s17, 0
      %p132 = por %p130, %p131
      %p133 = scmp.ne.s32.totalorder %s119, %s120
      %p134 = scmp.eq.s32.totalorder %s18, 1
      %p135 = por %p133, %p134
      %p137 = scmp.ne.s32.totalorder %s120, %s136
      %p138 = scmp.eq.s32.totalorder %s18, 0
      %p139 = por %p137, %p138
      %p140 = scmp.le.s32.totalorder 1, %s12
      %p141 = scmp.lt.s32.totalorder %s12, 3
      %p142 = pnand %p140, %p141
      %p143 = pneg %p142
      // Predicated region
      $region9: #{tpu_custom_call.1} parent=5 // pred_check
        _
      $region10: #{tpu_custom_call.1} parent=5 // pred_check_branch
        %145 = sbr.rel (%p142) target = $region12
      $region11: #{tpu_custom_call.1} parent=5 // pred_region
        %s146 = ssub.s32 %s12, 1
        // Predicated region
        $region13: #{tpu_custom_call.1} parent=11 // pred_check
          %p147 = pneg %p50
        $region14: #{tpu_custom_call.1} parent=11 // pred_check_branch
          %149 = sbr.rel (%p147) target = $region16
        $region15: #{tpu_custom_call.1} parent=11 // pred_region
          %s150 = smul.u32 2, %s21
          %p151 = scmp.lt.s32.totalorder %s150, 1
          %s152 = scalar_select %p151, %s150, 1
          %s153 = smul.addr %s152, 8
          %s154 = scalar_lea.vmem %s0, %s153
          %s155 = smul.u32 2, %s21
        $region16: #{tpu_custom_call.1} parent=11 // pred_fallthru
          _
        // Predicated region
        $region17: #{tpu_custom_call.1} parent=11 // pred_check
          %p156 = pneg %p76
        $region18: #{tpu_custom_call.1} parent=11 // pred_check_branch
          %158 = sbr.rel (%p156) target = $region20
        $region19: #{tpu_custom_call.1} parent=11 // pred_region
          %s159 = smul.u32 2, %s21
          %p160 = scmp.lt.s32.totalorder %s159, 1
          %s161 = scalar_select %p160, %s159, 1
          %s162 = smul.addr %s161, 8
          %s163 = scalar_lea.vmem %s1, %s162
          %s164 = smul.u32 2, %s21
        $region20: #{tpu_custom_call.1} parent=11 // pred_fallthru
          _
      $region12: #{tpu_custom_call.1} parent=5 // pred_fallthru
        _
      %p165 = scmp.lt.s32.totalorder %s12, 2
      // Predicated region
      $region21: #{tpu_custom_call.1} parent=5 // pred_check
        %p166 = pneg %p165
      $region22: #{tpu_custom_call.1} parent=5 // pred_check_branch
        %168 = sbr.rel (%p166) target = $region24
      $region23: #{tpu_custom_call.1} parent=5 // pred_region
        // Predicated region
        $region25: #{tpu_custom_call.1} parent=23 // pred_check
          %p169 = pneg %p98
        $region26: #{tpu_custom_call.1} parent=23 // pred_check_branch
          %171 = sbr.rel (%p169) target = $region28
        $region27: #{tpu_custom_call.1} parent=23 // pred_region
          %s172 = sand.u32 %s88, 1
          %s173 = sand.u32 %s88, 1
          %s174 = smul.addr %s173, 16
          %s175 = scalar_lea.vmem [#allocation2], %s174
          %s176 = smul.u32 2, %s19
          %s177 = smul.addr %s176, 2
          %s178 = sadd.s32 %s20, %s177
          %s179 = smul.addr %s178, 8
          %s180 = scalar_lea.vmem %s2, %s179
          // Predicated region
          $region29: #{tpu_custom_call.1} parent=27 // pred_check
            _
          $region30: #{tpu_custom_call.1} parent=27 // pred_check_branch
            %182 = sbr.rel (0) target = $region32
          $region31: #{tpu_custom_call.1} parent=27 // pred_region
            // Predicated region
            $region33: #{tpu_custom_call.1} parent=31 // pred_check
              _
            $region34: #{tpu_custom_call.1} parent=31 // pred_check_branch
              %184 = sbr.rel (0) target = $region36
            $region35: #{tpu_custom_call.1} parent=31 // pred_region
              // Predicated region
              $region48: #{tpu_custom_call.1} parent=35 // pred_check
                _
              $region49: #{tpu_custom_call.1} parent=35 // pred_check_branch
                %202 = sbr.rel (0) target = $region51
              $region50: #{tpu_custom_call.1} parent=35 // pred_region
                loop: start=0, step=1, limit=1
                $region52: #{tpu_custom_call.1} parent=50 // loop_pre_header
                  _
                $region53: #{tpu_custom_call.1} parent=50 // loop_header
                  %s204 = sphi 0, %s208
                  %p205 = scmp.ge.s32.totalorder %s204, 1
                  %s209 = sphi %s180, %s180
                  %s210 = sphi %s175, %s175
                $region54: #{tpu_custom_call.1} parent=50 // loop_header_branch
                  %207 = sbr.rel (%p205) target = $region58
                $region55: #{tpu_custom_call.1} parent=50 // loop_body
                  %v211 = vld [vmem:[%s209] sm:$0xff]
                  %212 = vst [vmem:[%s210] sm:$0xff] %v211
                  %v213 = vld [vmem:[%s209 + $0x10] sm:$0xff]
                  %214 = vst [vmem:[%s210 + $0x8] sm:$0xff] %v213
                $region56: #{tpu_custom_call.1} parent=50 // loop_footer
                  %s208 = sadd.s32 1, %s204
                $region57: #{tpu_custom_call.1} parent=50 // loop_footer_branch
                  %203 = sbr.rel target = $region53
                $region58: #{tpu_custom_call.1} parent=50 // loop_exit
                  _
              $region51: #{tpu_custom_call.1} parent=35 // pred_fallthru
                _
              // Predicated region
              $region59: #{tpu_custom_call.1} parent=35 // pred_check
                _
              $region60: #{tpu_custom_call.1} parent=35 // pred_check_branch
                %216 = sbr.rel target = $region62
              $region61: #{tpu_custom_call.1} parent=35 // pred_region
                _
              $region62: #{tpu_custom_call.1} parent=35 // pred_fallthru
                _
            $region36: #{tpu_custom_call.1} parent=31 // pred_fallthru
              _
            // Predicated region
            $region37: #{tpu_custom_call.1} parent=31 // pred_check
              _
            $region38: #{tpu_custom_call.1} parent=31 // pred_check_branch
              %186 = sbr.rel target = $region40
            $region39: #{tpu_custom_call.1} parent=31 // pred_region
              %s188 = ssub.s32 256, 1
              loop: start=0, step=1, limit=1
              $region41: #{tpu_custom_call.1} parent=39 // loop_pre_header
                _
              $region42: #{tpu_custom_call.1} parent=39 // loop_header
                %s190 = sphi 0, %s194
                %p191 = scmp.ge.s32.totalorder %s190, 1
                %s195 = sphi %s180, %s180
                %s196 = sphi %s175, %s175
              $region43: #{tpu_custom_call.1} parent=39 // loop_header_branch
                %193 = sbr.rel (%p191) target = $region47
              $region44: #{tpu_custom_call.1} parent=39 // loop_body
                %v197 = vld [vmem:[%s195] sm:%s188]
                %198 = vst [vmem:[%s196] sm:%s188] %v197
                %v199 = vld [vmem:[%s195 + $0x10] sm:%s188]
                %200 = vst [vmem:[%s196 + $0x8] sm:%s188] %v199
              $region45: #{tpu_custom_call.1} parent=39 // loop_footer
                %s194 = sadd.s32 1, %s190
              $region46: #{tpu_custom_call.1} parent=39 // loop_footer_branch
                %189 = sbr.rel target = $region42
              $region47: #{tpu_custom_call.1} parent=39 // loop_exit
                _
            $region40: #{tpu_custom_call.1} parent=31 // pred_fallthru
              _
          $region32: #{tpu_custom_call.1} parent=27 // pred_fallthru
            _
          %217 = vnop
        $region28: #{tpu_custom_call.1} parent=23 // pred_fallthru
          _
      $region24: #{tpu_custom_call.1} parent=5 // pred_fallthru
        _
      %p218 = scmp.le.s32.totalorder 1, %s12
      %p219 = scmp.lt.s32.totalorder %s12, 3
      %p220 = pnand %p218, %p219
      %p221 = pneg %p220
      // Predicated region
      $region63: #{tpu_custom_call.1} parent=5 // pred_check
        _
      $region64: #{tpu_custom_call.1} parent=5 // pred_check_branch
        %223 = sbr.rel (%p220) target = $region66
      $region65: #{tpu_custom_call.1} parent=5 // pred_region
        %s224 = ssub.s32 %s12, 1
        %s225 = sand.u32 %s91, 1
        %s226 = sand.u32 %s91, 1
        %s227 = smul.addr %s226, 16
        %s228 = scalar_lea.vmem [#allocation2], %s227
        // Predicated region
        $region67: #{tpu_custom_call.1} parent=65 // pred_check
          %p229 = pneg %p104
        $region68: #{tpu_custom_call.1} parent=65 // pred_check_branch
          %231 = sbr.rel (%p229) target = $region70
        $region69: #{tpu_custom_call.1} parent=65 // pred_region
          _
        $region70: #{tpu_custom_call.1} parent=65 // pred_fallthru
          _
        %s232 = smul.u32 2, %s21
        %p233 = scmp.lt.s32.totalorder %s232, 1
        %s234 = scalar_select %p233, %s232, 1
        %s235 = smul.addr %s234, 8
        %s236 = scalar_lea.vmem %s0, %s235
        %p237 = pneg %p50
        %p238 = pneg %p47
        %s239 = smul.u32 2, %s21
        %p240 = scmp.lt.s32.totalorder %s239, 1
        %s241 = scalar_select %p240, %s239, 1
        %s242 = smul.addr %s241, 8
        %s243 = scalar_lea.vmem %s1, %s242
        %p244 = pneg %p76
        %p245 = pneg %p73
        %s246 = sand.u32 %s91, 1
        %s247 = sand.u32 %s91, 1
        %s248 = smul.addr %s247, 16
        %s249 = scalar_lea.vmem [#allocation2], %s248
        %p250 = pneg %p104
        %p251 = pneg %p101
        %p252 = pneg %p132
        %p253 = pneg %p129
        %s254 = sand.u32 %s119, 1
        %s255 = scalar_lea.sflag [#allocation4], %s254
        %s256 = sand.u32 %s119, 1
        %s257 = smul.addr %s256, 16
        %s258 = scalar_lea.vmem [#allocation3], %s257
        %s259 = smul.u32 2, %s21
        %p260 = scmp.lt.s32.totalorder %s259, 1
        %s261 = scalar_select %p260, %s259, 1
        %s262 = smul.addr %s261, 8
        %s263 = scalar_lea.vmem %s0, %s262
        %s264 = smul.u32 2, %s21
        %s265 = smul.u32 2, %s21
        %p266 = scmp.lt.s32.totalorder %s265, 1
        %s267 = scalar_select %p266, %s265, 1
        %s268 = smul.addr %s267, 8
        %s269 = scalar_lea.vmem %s1, %s268
        %s270 = smul.u32 2, %s21
        %s271 = smul.u32 2, %s21
        %s272 = smul.u32 2, %s21
        %v273 = vld [vmem:[%s228] sm:$0xff]
        %v274 = vld [vmem:[%s228 + $0x8] sm:$0xff]
        %v275 = vld [vmem:[%s263] sm:$0xff]
        %v276 = vld [vmem:[%s263 + $0x8] sm:$0xff]
        %278 = vset.pattern.permute.xlu0 0
        %279 = vperm.xlu0 %278, %v275
        %v280 = vpop.permute.xlu0 %279
        %283 = vset.pattern.permute.xlu0 0
        %284 = vperm.xlu0 %283, %v276
        %v285 = vpop.permute.xlu0 %284
        %v287 = vmul.f32 %v273, %v280
        %v288 = vmul.f32 %v274, %v285
        %v289 = vld [vmem:[%s269] sm:$0xff]
        %v290 = vld [vmem:[%s269 + $0x8] sm:$0xff]
        %292 = vset.pattern.permute.xlu0 0
        %293 = vperm.xlu0 %292, %v289
        %v294 = vpop.permute.xlu0 %293
        %297 = vset.pattern.permute.xlu0 0
        %298 = vperm.xlu0 %297, %v290
        %v299 = vpop.permute.xlu0 %298
        %v301 = vadd.f32 %v287, %v294
        %v302 = vadd.f32 %v288, %v299
        %v303 = vsub.f32 0.0, %v301
        %v304 = vsub.f32 0.0, %v302
        %v305 = vmul.f32 %v303, 1.442695
        %v306 = vpow.pop %v305
        %v307 = vmul.f32 %v304, 1.442695
        %v308 = vpow.pop %v307
        %v309 = vadd.f32 %v306, 1.0
        %v310 = vadd.f32 %v308, 1.0
        %v311 = vrcp.pop %v309
        %v312 = vrcp.pop %v310
        %v313 = vmul.f32 %v301, %v311
        %v314 = vmul.f32 %v302, %v312
        %315 = vst [vmem:[%s258] sm:$0xff] %v313
        %316 = vst [vmem:[%s258 + $0x8] sm:$0xff] %v314
        %s317 = sand.u32 %s119, 1
        %s318 = scalar_lea.sflag [#allocation4], %s317
        %s319 = sand.u32 %s119, 1
        %s320 = smul.addr %s319, 16
        %s321 = scalar_lea.vmem [#allocation3], %s320
        // Predicated region
        $region71: #{tpu_custom_call.1} parent=65 // pred_check
          %p322 = pneg %p129
        $region72: #{tpu_custom_call.1} parent=65 // pred_check_branch
          %324 = sbr.rel (%p322) target = $region74
        $region73: #{tpu_custom_call.1} parent=65 // pred_region
          %s325 = smul.u32 2, %s21
          %s327 = ssub.s32 256, 256
          %328 = vsyncadd %s318, %s327
          %s329 = smul.addr %s325, 2
          %s330 = sadd.s32 %s22, %s329
          %s331 = smul.addr %s330, 128
          %s332 = scalar_lea.hbm %s3, %s331
          %s333 = sshll.u32 %s321, 4
          %s334 = int_to_ptr.vmem [resolvable:$true] %s333
          %339 = dma.vmem_to_hbm [thread:$0]  %s334, 256, %s332, %s318, 128, 256, 8
        $region74: #{tpu_custom_call.1} parent=65 // pred_fallthru
          _
      $region66: #{tpu_custom_call.1} parent=5 // pred_fallthru
        _
      %p340 = scmp.le.s32.totalorder 2, %s12
      // Predicated region
      $region75: #{tpu_custom_call.1} parent=5 // pred_check
        %p341 = pneg %p340
      $region76: #{tpu_custom_call.1} parent=5 // pred_check_branch
        %343 = sbr.rel (%p341) target = $region78
      $region77: #{tpu_custom_call.1} parent=5 // pred_region
        %s344 = ssub.s32 %s12, 2
        // Predicated region
        $region79: #{tpu_custom_call.1} parent=77 // pred_check
          %p345 = pneg %p135
        $region80: #{tpu_custom_call.1} parent=77 // pred_check_branch
          %347 = sbr.rel (%p345) target = $region82
        $region81: #{tpu_custom_call.1} parent=77 // pred_region
          %s348 = sand.u32 %s120, 1
          %s349 = scalar_lea.sflag [#allocation4], %s348
          %s350 = sand.u32 %s120, 1
          %s351 = smul.addr %s350, 16
          %s352 = scalar_lea.vmem [#allocation3], %s351
          %353 = dma.done %s349, 256
        $region82: #{tpu_custom_call.1} parent=77 // pred_fallthru
          _
      $region78: #{tpu_custom_call.1} parent=5 // pred_fallthru
        _
    $region6: #{tpu_custom_call.1} parent=1 // loop_footer
      %s16 = sadd.s32 1, %s12
    $region7: #{tpu_custom_call.1} parent=1 // loop_footer_branch
      %11 = sbr.rel target = $region3
    $region8: #{tpu_custom_call.1} parent=1 // loop_exit
      _
    %354 = vsyncpa [#allocation4], 1
    %s355 = scalar_lea.sflag [#allocation4], 1
    %356 = vsyncpa %s355, 1

</llo_original>
